<compile_context>
chip_gen: v7x
topology: tpu7x:2x2x1
jax: 0.10.0
libtpu: 0.0.40
codegen_flags: <defaults>
</compile_context>

<pallas_src>
import jax
import jax.numpy as jnp
from jax.experimental import pallas as pl
from jax.experimental.pallas import tpu as pltpu


_VMEM = pl.BlockSpec(memory_space=pltpu.MemorySpace.VMEM)


# --------------------------------------------------------------------------- #
# Pallas kernels (single-block: grid omitted, whole arrays resident in VMEM)
# --------------------------------------------------------------------------- #
def _linear_bias_kernel(w_ref, x_ref, bias_ref, o_ref):
    """o = W @ x + bias on lane-dense (J, N) slabs (N = batch * nfeats * nframes).

    One MXU matmul + one VALU add + one unmasked lane-dense store. Serves both the
    fused CFG path (bias = blended CFG bias) and a single (un)conditional model pass.
    """
    o_ref[...] = (
        jnp.dot(w_ref[...], x_ref[...], preferred_element_type=jnp.float32)
        + bias_ref[...]
    ).astype(o_ref.dtype)


def _cfg_blend_kernel(scale_ref, both_ref, o_ref):
    """CFG blend  u + s * (c - u)  on lane-dense rows.

    scale_ref : VMEM (B, 1)       per-batch guidance scale (lane-broadcast)
    both_ref  : VMEM (2, B, N)    [0] = conditional output, [1] = unconditional
    o_ref     : VMEM (B, N)
    """
    c = both_ref[0]
    u = both_ref[1]
    s = scale_ref[...]
    o_ref[...] = (u + s * (c - u)).astype(o_ref.dtype)


def _linear_bias_call(w, x_slab, bias_slab):
    """Single-block pallas_call wrapper around _linear_bias_kernel."""
    J, N = x_slab.shape
    return pl.pallas_call(
        _linear_bias_kernel,
        out_shape=jax.ShapeDtypeStruct((J, N), x_slab.dtype),
        in_specs=[_VMEM, _VMEM, _VMEM],
        out_specs=_VMEM,
        cost_estimate=pl.CostEstimate(
            flops=2 * J * J * N + J * N,
            transcendentals=0,
            bytes_accessed=4 * (J * J + 3 * J * N),
        ),
    )(w, x_slab, bias_slab)


# --------------------------------------------------------------------------- #
# Synthetic stand-in for the wrapped diffusion model
# --------------------------------------------------------------------------- #
class SyntheticCondModel:
    """Tiny deterministic stand-in: (x, timesteps, y) -> same-shape output.

    It is linear in its conditioning, which the fused CFG path exploits.
    """

    is_linear_in_conditioning = True   # capability flag checked by the sampler

    def __init__(self, njoints, nfeats, num_actions=8, num_timesteps=50,
                 cond_mask_prob=0.1, key=None):
        self.njoints = njoints
        self.nfeats = nfeats
        self.translation = True
        self.data_rep = "rot6d"
        self.cond_mode = "action"
        self.cond_mask_prob = cond_mask_prob
        key = jax.random.PRNGKey(42) if key is None else key
        kw, kt, ka = jax.random.split(key, 3)
        self.W = jax.random.normal(kw, (njoints, njoints), jnp.float32) / jnp.sqrt(
            jnp.float32(njoints))
        self.t_emb = 0.1 * jax.random.normal(kt, (num_timesteps, njoints), jnp.float32)
        self.a_emb = 0.1 * jax.random.normal(ka, (num_actions, njoints), jnp.float32)

    # ----- layout helpers: fold batch into the lane axis -------------------- #
    @staticmethod
    def _to_slab(x):
        B, J, F, T = x.shape
        M = F * T
        return x.reshape(B, J, M).transpose(1, 0, 2).reshape(J, B * M), (B, J, F, T)

    @staticmethod
    def _from_slab(slab, shape):
        B, J, F, T = shape
        M = F * T
        return slab.reshape(J, B, M).transpose(1, 0, 2).reshape(B, J, F, T)

    @staticmethod
    def _bias_slab(bias, shape):
        """(B, J) per-joint bias broadcast over the B*M lane axis -> (J, B*M)."""
        B, J, F, T = shape
        M = F * T
        return jnp.broadcast_to(bias.T[:, :, None], (J, B, M)).reshape(J, B * M)

    # ----- embedding glue (fused by jit around the pallas calls) ------------ #
    def _bias(self, timesteps, y):
        bias = self.t_emb[timesteps]                        # (B, J)
        a_bias = self.a_emb[y["action"]]                    # (B, J)
        if "uncond_mask" in y:
            # Per-sample uncond masking (used by the batched cond+uncond CFG path).
            keep = 1.0 - y["uncond_mask"].astype(jnp.float32)[:, None]
            bias = bias + keep * a_bias
        elif not y.get("uncond", False):
            bias = bias + a_bias                            # dropped when uncond=True
        return bias

    # ----- single (un)conditional pass (generic black-box path) ------------- #
    def __call__(self, x, timesteps, y):
        x_slab, shape = self._to_slab(x)
        bias_slab = self._bias_slab(self._bias(timesteps, y), shape)
        out = _linear_bias_call(self.W, x_slab, bias_slab)
        return self._from_slab(out, shape)

    # ----- fully fused CFG forward (valid because the model is linear) ------ #
    def fused_cfg(self, x, timesteps, y, scale):
        B = x.shape[0]
        scale = jnp.broadcast_to(jnp.asarray(scale, jnp.float32).reshape(-1), (B,))
        # out_u + s*(out_c - out_u) == W@x + t_emb[t] + s * a_emb[a]
        bias = self.t_emb[timesteps] + scale[:, None] * self.a_emb[y["action"]]
        x_slab, shape = self._to_slab(x)
        bias_slab = self._bias_slab(bias, shape)
        out = _linear_bias_call(self.W, x_slab, bias_slab)   # ONE pallas_call total
        return self._from_slab(out, shape)

    # ----- pure-JAX reference (correctness checking only) ------------------- #
    def reference(self, x, timesteps, y):
        B, J, F, T = x.shape
        x3 = x.reshape(B, J, F * T)
        bias = self._bias(timesteps, y)[:, :, None]
        out = jnp.einsum("jk,bkm->bjm", self.W, x3,
                         precision=jax.lax.Precision.HIGHEST) + bias
        return out.reshape(B, J, F, T)


# --------------------------------------------------------------------------- #
# ClassifierFreeSampleModel
# --------------------------------------------------------------------------- #
class ClassifierFreeSampleModel:
    def __init__(self, model):
        assert model.cond_mask_prob > 0, (
            "Cannot run a guided diffusion on a model that has not been trained "
            "with no conditions")
        self.model = model
        self.translation = model.translation
        self.njoints = model.njoints
        self.nfeats = model.nfeats
        self.data_rep = model.data_rep
        self.cond_mode = model.cond_mode
        # jit the whole forward so the embedding gathers / transposes / reshapes
        # around the pallas custom calls fuse into the same XLA program.
        self._fused_jit = jax.jit(self._forward_fused)
        self._generic_jit = jax.jit(self._forward_generic)

    def forward(self, x, timesteps, y=None, *, use_fused=True):
        assert self.model.cond_mode in ["text", "action"]
        y = dict(y)  # do not mutate the caller's dict (original code sets y['uncond'])
        # The fused path is only valid when the wrapped model is exactly linear in its
        # conditioning -> gate on an explicit capability flag, not hasattr.
        if use_fused and getattr(self.model, "is_linear_in_conditioning", False):
            return self._fused_jit(x, timesteps, y["action"], y["scale"])
        return self._generic_jit(x, timesteps, y["action"], y["scale"])

    # Fast path: 1 pallas_call.
    def _forward_fused(self, x, timesteps, action, scale):
        return self.model.fused_cfg(x, timesteps, {"action": action}, scale)

    # Generic black-box path: batched cond+uncond model pass + blend = 2 pallas_calls.
    def _forward_generic(self, x, timesteps, action, scale):
        B = x.shape[0]
        x_cat = jnp.concatenate([x, x], axis=0)                       # (2B, J, F, T)
        t_cat = jnp.concatenate([timesteps, timesteps], axis=0)
        y_cat = {
            "action": jnp.concatenate([action, action], axis=0),
            "uncond_mask": jnp.concatenate(
                [jnp.zeros((B,), jnp.float32), jnp.ones((B,), jnp.float32)]),
        }
        out_cat = self.model(x_cat, t_cat, y_cat)                     # one model pass
        _, J, F, T = out_cat.shape
        JFT = J * F * T
        both = out_cat.reshape(2, B, JFT)            # bitcast: [0] = cond, [1] = uncond
        s = jnp.broadcast_to(jnp.asarray(scale, jnp.float32).reshape(-1),
                             (B,)).reshape(B, 1)
        res = pl.pallas_call(
            _cfg_blend_kernel,
            out_shape=jax.ShapeDtypeStruct((B, JFT), out_cat.dtype),
            in_specs=[_VMEM, _VMEM],
            out_specs=_VMEM,
            cost_estimate=pl.CostEstimate(
                flops=3 * B * JFT,
                transcendentals=0,
                bytes_accessed=4 * (3 * B * JFT + B),
            ),
        )(s, both)
        return res.reshape(x.shape)

    # pure-JAX reference of the full forward (for verification)
    def reference(self, x, timesteps, y):
        y_c = dict(y); y_c["uncond"] = False
        y_u = dict(y); y_u["uncond"] = True
        out = self.model.reference(x, timesteps, y_c)
        out_uncond = self.model.reference(x, timesteps, y_u)
        B = x.shape[0]
        s = jnp.broadcast_to(jnp.asarray(y["scale"], jnp.float32).reshape(-1),
                             (B,)).reshape(B, 1, 1, 1)
        return out_uncond + s * (out - out_uncond)


# --------------------------------------------------------------------------- #
if __name__ == "__main__":
    # batch, njoints, nfeats, nframes  ->  lane slab widths: fused (16, 256),
    # batched generic pass (16, 512), blend (2, 2048): all lane-dense.
    B, J, F, T = 2, 16, 4, 32
    key = jax.random.PRNGKey(0)
    kx, kt, ka, ks = jax.random.split(key, 4)

    x = jax.random.normal(kx, (B, J, F, T), jnp.float32)
    timesteps = jax.random.randint(kt, (B,), 0, 50)
    y = {
        "action": jax.random.randint(ka, (B,), 0, 8),
        "scale": 2.5 * jnp.ones((B,), jnp.float32) + 0.1 * jax.random.normal(ks, (B,)),
    }

    inner = SyntheticCondModel(njoints=J, nfeats=F)
    sampler = ClassifierFreeSampleModel(inner)

    result_fused = sampler.forward(x, timesteps, y)                      # 1 pallas_call
    result_generic = sampler.forward(x, timesteps, y, use_fused=False)   # 2 pallas_calls
    jax.block_until_ready((result_fused, result_generic))

    ref = sampler.reference(x, timesteps, y)
    assert result_fused.shape == (B, J, F, T)
    assert result_generic.shape == (B, J, F, T)
    assert jnp.allclose(result_fused, ref, atol=1e-4, rtol=1e-4)
    assert jnp.allclose(result_generic, ref, atol=1e-4, rtol=1e-4)

    print("KERNEL_OK")
</pallas_src>

<mosaic_0001>
module attributes {stable_mosaic.version = 11 : i64} {
  func.func @_linear_bias_kernel(%arg0: memref<16x16xf32, #tpu.memory_space<vmem>>, %arg1: memref<16x256xf32, #tpu.memory_space<vmem>>, %arg2: memref<16x256xf32, #tpu.memory_space<vmem>>, %arg3: memref<16x256xf32, #tpu.memory_space<vmem>>) attributes {dimension_semantics = [], scalar_prefetch = 0 : i64, scratch_operands = 0 : i64, tpu.core_type = #tpu.core_type<tc>} {
    %c0 = arith.constant 0 : index
    %c0_0 = arith.constant 0 : index
    %0 = vector.load %arg0[%c0, %c0_0] : memref<16x16xf32, #tpu.memory_space<vmem>>, vector<16x16xf32>
    %c0_1 = arith.constant 0 : index
    %c0_2 = arith.constant 0 : index
    %1 = vector.load %arg1[%c0_1, %c0_2] : memref<16x256xf32, #tpu.memory_space<vmem>>, vector<16x256xf32>
    %cst = arith.constant dense<0.000000e+00> : vector<16x256xf32>
    %2 = tpu.matmul %0, %1, %cst {dimension_numbers = #tpu.dot_dimension_numbers<[1], [0], [0], [1], [0, 0, 1, 1], [], []>} : vector<16x16xf32>, vector<16x256xf32>, vector<16x256xf32> -> vector<16x256xf32>
    %c0_3 = arith.constant 0 : index
    %c0_4 = arith.constant 0 : index
    %3 = vector.load %arg2[%c0_3, %c0_4] : memref<16x256xf32, #tpu.memory_space<vmem>>, vector<16x256xf32>
    %4 = arith.addf %2, %3 : vector<16x256xf32>
    %c0_5 = arith.constant 0 : index
    %c0_6 = arith.constant 0 : index
    %5 = vector.load %arg3[%c0_5, %c0_6] : memref<16x256xf32, #tpu.memory_space<vmem>>, vector<16x256xf32>
    tpu.vector_store %arg3[%c0_5, %c0_6], %4 {strides = array<i32>} : memref<16x256xf32, #tpu.memory_space<vmem>>, vector<16x256xf32>,
    return
  }
}

</mosaic_0001>

<llo_original>
// kernel: _forward_fused.1
$region0: #{_forward_fused.1}
  #allocation0 [shape = 'u32[]', space=smem, size = 0x4, offset = 0x4, fixed_abs, tag = 'smem constant byte address 0x4 - core index']
  #allocation1 [shape = 'u32[144,128]{1,0:T(1,128)}', space=vmem, size = 0x12000, scoped, tag = 'internal scratch']
  %s0 = inlined_call_operand.vmem [shape: f32[16,16], index: 0, kind: input, shape index: {}]
  %s1 = inlined_call_operand.vmem [shape: f32[16,256], index: 1, kind: input, shape index: {}]
  %s2 = inlined_call_operand.vmem [shape: f32[16,256], index: 2, kind: input, shape index: {}]
  %s3 = inlined_call_operand.vmem [shape: f32[16,256], index: 3, kind: output, shape index: {}]
  %s4 = sld [smem:[#allocation0]]
  $region22: #{_forward_fused.1} parent=0
    _
  %s6 = ssub.s32 1, %s4
  %s7 = scalar_select 0, %s6, %s4
  // Predicated region
  $region2: #{_forward_fused.1} parent=0 // pred_check
    _
  $region3: #{_forward_fused.1} parent=0 // pred_check_branch
    %9 = sbr.rel (0) target = $region5
  $region4: #{_forward_fused.1} parent=0 // pred_region
    _
  $region5: #{_forward_fused.1} parent=0 // pred_fallthru
    _
  // Predicated region
  $region6: #{_forward_fused.1} parent=0 // pred_check
    _
  $region7: #{_forward_fused.1} parent=0 // pred_check_branch
    %11 = sbr.rel (0) target = $region9
  $region8: #{_forward_fused.1} parent=0 // pred_region
    _
  $region9: #{_forward_fused.1} parent=0 // pred_fallthru
    _
  // Predicated region
  $region10: #{_forward_fused.1} parent=0 // pred_check
    _
  $region11: #{_forward_fused.1} parent=0 // pred_check_branch
    %13 = sbr.rel (0) target = $region13
  $region12: #{_forward_fused.1} parent=0 // pred_region
    _
  $region13: #{_forward_fused.1} parent=0 // pred_fallthru
    _
  %v14 = vld [vmem:[%s0] sm:$0xff]
  %v15 = vld [vmem:[%s0 + $0x8] sm:$0xff]
  %v16 = vld [vmem:[%s1] sm:$0xff]
  %v17 = vld [vmem:[%s1 + $0x8] sm:$0xff]
  %v18 = vld [vmem:[%s1 + $0x10] sm:$0xff]
  %v19 = vld [vmem:[%s1 + $0x18] sm:$0xff]
  %v20 = vld [vmem:[%s2] sm:$0xff]
  %v21 = vld [vmem:[%s2 + $0x8] sm:$0xff]
  %v22 = vld [vmem:[%s2 + $0x10] sm:$0xff]
  %v23 = vld [vmem:[%s2 + $0x18] sm:$0xff]
  %vm24 = vcmask 130048
  %v26 = vsel %vm24, %v14, 0
  %v29 = vsel %vm24, %v15, 0
  %31 = vmatprep.subr.mxu0 %v17
  %32 = vmatpush1.msra.mxu0 %v16
  %33 = vmatprep.subr.mxu0 %v19
  %34 = vmatpush1.msra.mxu0 %v18
  %35 = vmatprep.subr.mxu0 0.0
  %36 = vmatpush1.msra.mxu0 0.0
  %37 = vmatprep.subr.mxu0 0.0
  %38 = vmatpush1.msra.mxu0 0.0
  %39 = vmatprep.subr.mxu0 0.0
  %40 = vmatpush1.msra.mxu0 0.0
  %41 = vmatprep.subr.mxu0 0.0
  %42 = vmatpush1.msra.mxu0 0.0
  %43 = vmatprep.subr.mxu0 0.0
  %44 = vmatpush1.msra.mxu0 0.0
  %45 = vmatprep.subr.mxu0 0.0
  %46 = vmatpush1.msra.mxu0 0.0
  %47 = vmatprep.subr.mxu0 0.0
  %48 = vmatpush1.msra.mxu0 0.0
  %49 = vmatprep.subr.mxu0 0.0
  %50 = vmatpush1.msra.mxu0 0.0
  %51 = vmatprep.subr.mxu0 0.0
  %52 = vmatpush1.msra.mxu0 0.0
  %53 = vmatprep.subr.mxu0 0.0
  %54 = vmatpush1.msra.mxu0 0.0
  %55 = vmatprep.subr.mxu0 0.0
  %56 = vmatpush1.msra.mxu0 0.0
  %57 = vmatprep.subr.mxu0 0.0
  %58 = vmatpush1.msra.mxu0 0.0
  %59 = vmatprep.subr.mxu0 0.0
  %60 = vmatpush1.msra.mxu0 0.0
  %61 = vmatprep.subr.mxu0 0.0
  %62 = vmatpush1.msra.mxu0 0.0
  %63 = vmatprep.subr.mxu0 0.0
  %64 = vmatpush1.msra.mxu0 0.0
  %65 = vmatprep.subr.mxu0 0.0
  %66 = vmatpush1.msra.mxu0 0.0
  %67 = vmatprep.subr.mxu0 0.0
  %68 = vmatpush1.msra.mxu0 0.0
  %69 = vmatprep.subr.mxu0 0.0
  %70 = vmatpush1.msra.mxu0 0.0
  %71 = vmatprep.subr.mxu0 0.0
  %72 = vmatpush1.msra.mxu0 0.0
  %73 = vmatprep.subr.mxu0 0.0
  %74 = vmatpush1.msra.mxu0 0.0
  %75 = vmatprep.subr.mxu0 0.0
  %76 = vmatpush1.msra.mxu0 0.0
  %77 = vmatprep.subr.mxu0 0.0
  %78 = vmatpush1.msra.mxu0 0.0
  %79 = vmatprep.subr.mxu0 0.0
  %80 = vmatpush1.msra.mxu0 0.0
  %81 = vmatprep.subr.mxu0 0.0
  %82 = vmatpush1.msra.mxu0 0.0
  %83 = vmatprep.subr.mxu0 0.0
  %84 = vmatpush1.msra.mxu0 0.0
  %85 = vmatprep.subr.mxu0 0.0
  %86 = vmatpush1.msra.mxu0 0.0
  %87 = vmatprep.subr.mxu0 0.0
  %88 = vmatpush1.msra.mxu0 0.0
  %89 = vmatprep.subr.mxu0 0.0
  %90 = vmatpush1.msra.mxu0 0.0
  %91 = vmatprep.subr.mxu0 0.0
  %92 = vmatpush1.msra.mxu0 0.0
  %93 = vmatprep.subr.mxu0 0.0
  %94 = vmatpush1.msra.mxu0 0.0
  %95 = vmatprep.mubr.f32.mxu0 0.0
  %96 = vmatmul.mubr.f32.gmra.mrb[0].mxu0 %v26
  %v97 = vpop.f32.mrb[0].mxu0
  %v98 = vadd.f32 %v20, %v97
  %v99 = vpop.f32.mrb[0].mxu0
  %v100 = vadd.f32 %v21, %v99
  %101 = vmatprep.mubr.f32.mxu0 0.0
  %102 = vmatmul.mubr.f32.gmra.mrb[0].mxu0 %v29
  %v103 = vpop.f32.mrb[0].mxu0
  %v104 = vadd.f32 %v22, %v103
  %v105 = vpop.f32.mrb[0].mxu0
  %v106 = vadd.f32 %v23, %v105
  %107 = vdwg.mxu0
  %108 = vst [vmem:[%s3] sm:$0xff] %v98
  %109 = vst [vmem:[%s3 + $0x8] sm:$0xff] %v100
  %110 = vst [vmem:[%s3 + $0x10] sm:$0xff] %v104
  %111 = vst [vmem:[%s3 + $0x18] sm:$0xff] %v106
  // Predicated region
  $region14: #{_forward_fused.1} parent=0 // pred_check
    _
  $region15: #{_forward_fused.1} parent=0 // pred_check_branch
    %113 = sbr.rel (0) target = $region17
  $region16: #{_forward_fused.1} parent=0 // pred_region
    _
  $region17: #{_forward_fused.1} parent=0 // pred_fallthru
    _
  // Predicated region
  $region18: #{_forward_fused.1} parent=0 // pred_check
    _
  $region19: #{_forward_fused.1} parent=0 // pred_check_branch
    %115 = sbr.rel (0) target = $region21
  $region20: #{_forward_fused.1} parent=0 // pred_region
    _
  $region21: #{_forward_fused.1} parent=0 // pred_fallthru
    _

</llo_original>
